<compile_context>
chip_gen: v5e
topology: v5e:2x2
jax: 0.10.0
libtpu: 0.0.40
codegen_flags: <defaults>
</compile_context>

<pallas_src>
import functools
import math

import jax
import jax.numpy as jnp
from jax.experimental import pallas as pl
from jax.experimental.pallas import tpu as pltpu


def _round_up(x: int, m: int) -> int:
    return (x + m - 1) // m * m


def _cdiv(a: int, b: int) -> int:
    return (a + b - 1) // b


@functools.cache
def _vmem_capacity_bytes() -> int:
    """Physical VMEM per core; conservative 64 MiB fallback (v7x-sized)."""
    try:
        info = pltpu.get_tpu_info()
        cap = int(getattr(info, "vmem_capacity_bytes", 0) or 0)
        if cap > 0:
            return cap
    except Exception:
        pass
    return 64 << 20


def _pick_tm(M: int, max_tm: int, sub: int) -> int:
    """Batch-tile rows: as large as VMEM allows, but keep >= 2 grid steps when
    M permits so both v7x TensorCores get work under 'parallel' semantics."""
    max_tm = max(sub, (max_tm // sub) * sub)
    m_full = _round_up(M, sub)
    if M <= sub:
        return min(max_tm, m_full)
    for cand in (1024, 512, 256, 128, 64, 32, 16, 8):
        if cand % sub:
            continue
        if cand <= max_tm and M > cand:
            return cand
    # Whole batch fits one small tile; split roughly in half (>= 2 steps).
    return min(max_tm, m_full, max(sub, _round_up(_cdiv(M, 2), sub)))


# ---------------------------------------------------------------------------
# Kernels
# ---------------------------------------------------------------------------

def _rsr_resident_kernel(x_ref, a_ref, o_ref):
    """A fully resident in VMEM; one MXU matmul per batch tile."""
    o_ref[...] = jnp.dot(
        x_ref[...], a_ref[...], preferred_element_type=jnp.float32
    ).astype(o_ref.dtype)


def _rsr_tiled_kernel_f32out(x_ref, a_ref, o_ref):
    """K-tiled matmul accumulating directly into the resident f32 output tile."""
    @pl.when(pl.program_id(2) == 0)
    def _():
        o_ref[...] = jnp.zeros_like(o_ref)

    o_ref[...] += jnp.dot(
        x_ref[...], a_ref[...], preferred_element_type=jnp.float32
    )


def _rsr_tiled_kernel_acc(x_ref, a_ref, o_ref, acc_ref):
    """K-tiled matmul with an f32 scratch accumulator (non-f32 outputs)."""
    k = pl.program_id(2)

    @pl.when(k == 0)
    def _():
        acc_ref[...] = jnp.zeros_like(acc_ref)

    acc_ref[...] += jnp.dot(
        x_ref[...], a_ref[...], preferred_element_type=jnp.float32
    )

    @pl.when(k == pl.num_programs(2) - 1)
    def _():
        o_ref[...] = acc_ref[...].astype(o_ref.dtype)


# ---------------------------------------------------------------------------
# Wrapper
# ---------------------------------------------------------------------------

def rsr_forward(
    x: jax.Array,
    A: jax.Array,
    *,
    compute_dtype=None,             # e.g. jnp.bfloat16: halves HBM traffic, f32 accum kept
    vmem_budget_bytes=None,         # None -> ~3/4 of physical VMEM (generation-aware)
) -> jax.Array:
    """Pallas implementation of RSR.forward: x @ A."""
    M, K = x.shape
    K2, N = A.shape
    assert K == K2, "in_features mismatch"

    out_dtype = x.dtype
    x_c = x if compute_dtype is None else x.astype(compute_dtype)
    a_c = A if compute_dtype is None else A.astype(compute_dtype)
    in_dtype = x_c.dtype

    bx = jnp.dtype(in_dtype).itemsize
    bo = jnp.dtype(out_dtype).itemsize
    sub = 16 if jnp.dtype(in_dtype) == jnp.dtype(jnp.bfloat16) else 8

    phys = _vmem_capacity_bytes()
    # ~96 MiB on 128-MiB parts (v5e/v6e), ~48 MiB on v7x (64 MiB VMEM).
    budget = int(vmem_budget_bytes) if vmem_budget_bytes is not None else (phys * 3) // 4

    # VMEM layouts round the last two dims up to (8, 128) tiles.
    K_eff = _round_up(K, 128)
    N_eff = _round_up(N, 128)

    # ---------------- Regime A: A fully resident (single-buffered) ----------
    a_bytes = K_eff * N_eff * bx                       # one buffer (pl.Buffered(1))
    tm_chk = min(_round_up(M, sub), 128)
    per_row = 2 * (K_eff * bx + N_eff * bo)            # x + out tiles, double-buffered

    if a_bytes + tm_chk * per_row <= budget:
        max_tm = max(sub, min(1024, (budget - a_bytes) // per_row))
        tm = _pick_tm(M, max_tm, sub)
        grid_m = _cdiv(M, tm)

        footprint = a_bytes + tm * per_row
        vmem_limit = int(min(phys, max(32 << 20, footprint + (4 << 20))))

        cost = pl.CostEstimate(
            flops=2 * M * N * K,
            transcendentals=0,
            bytes_accessed=M * K * bx + K * N * bx + M * N * bo,
        )

        return pl.pallas_call(
            _rsr_resident_kernel,
            out_shape=jax.ShapeDtypeStruct((M, N), out_dtype),
            grid_spec=pltpu.PrefetchScalarGridSpec(
                num_scalar_prefetch=0,
                grid=(grid_m,),
                in_specs=[
                    # x: batch-tiled, K kept as a full-extent block dim (no pad).
                    pl.BlockSpec((tm, K), lambda i: (i, 0)),
                    # A: constant index_map -> fetched once; single buffer.
                    pl.BlockSpec((K, N), lambda i: (0, 0),
                                 pipeline_mode=pl.Buffered(1)),
                ],
                out_specs=pl.BlockSpec((tm, N), lambda i: (i, 0)),
            ),
            compiler_params=pltpu.CompilerParams(
                dimension_semantics=("parallel",),
                vmem_limit_bytes=vmem_limit,
            ),
            cost_estimate=cost,
        )(x_c, a_c)

    # ---------------- Regime B: huge weight -> (M, N, K)-tiled matmul -------
    # K / N tiles divide the 128-rounded dims exactly, so only the K columns of
    # x and K/N of A need zero padding; the batch dim stays un-padded (cdiv grid).
    K_pad, N_pad = K_eff, N_eff
    tk = next(c for c in (1024, 512, 256, 128) if K_pad % c == 0)
    tn = next(c for c in (512, 256, 128) if N_pad % c == 0)
    tm = min(512, _round_up(M, sub))

    xp = x_c if K_pad == K else jnp.pad(x_c, ((0, 0), (0, K_pad - K)))
    ap = a_c if (K_pad == K and N_pad == N) else jnp.pad(
        a_c, ((0, K_pad - K), (0, N_pad - N)))

    gm, gn, gk = _cdiv(M, tm), N_pad // tn, K_pad // tk

    if jnp.dtype(out_dtype) == jnp.dtype(jnp.float32):
        kernel, scratch, scratch_bytes = _rsr_tiled_kernel_f32out, [], 0
    else:
        kernel = _rsr_tiled_kernel_acc
        scratch = [pltpu.VMEM((tm, tn), jnp.float32)]
        scratch_bytes = tm * tn * 4

    footprint = 2 * (tm * tk * bx + tk * tn * bx + tm * tn * bo) + scratch_bytes
    vmem_limit = int(min(phys, max(32 << 20, footprint + (4 << 20))))

    cost = pl.CostEstimate(
        flops=2 * M * N_pad * K_pad,
        transcendentals=0,
        bytes_accessed=M * K_pad * bx * gn + K_pad * N_pad * bx * gm + M * N_pad * bo,
    )

    out = pl.pallas_call(
        kernel,
        out_shape=jax.ShapeDtypeStruct((M, N_pad), out_dtype),
        grid_spec=pltpu.PrefetchScalarGridSpec(
            num_scalar_prefetch=0,
            grid=(gm, gn, gk),
            in_specs=[
                pl.BlockSpec((tm, tk), lambda i, j, k: (i, k)),
                pl.BlockSpec((tk, tn), lambda i, j, k: (k, j)),
            ],
            out_specs=pl.BlockSpec((tm, tn), lambda i, j, k: (i, j)),
            scratch_shapes=scratch,
        ),
        compiler_params=pltpu.CompilerParams(
            dimension_semantics=("parallel", "parallel", "arbitrary"),
            vmem_limit_bytes=vmem_limit,
        ),
        cost_estimate=cost,
    )(xp, ap)
    return out if N_pad == N else out[:, :N]


def init_rsr_params(key: jax.Array, in_features: int, out_features: int,
                    dtype=jnp.float32) -> jax.Array:
    """Deterministic xavier_uniform init matching nn.init.xavier_uniform_."""
    bound = math.sqrt(6.0 / (in_features + out_features))
    return jax.random.uniform(
        key, (in_features, out_features), dtype=dtype, minval=-bound, maxval=bound
    )


if __name__ == "__main__":
    key = jax.random.PRNGKey(0)
    k_x, k_a, k_x2, k_a2, k_x3 = jax.random.split(key, 5)

    # Test 1: small aligned shapes -- resident-A fast path, single batch tile.
    batch, in_features, out_features = 8, 256, 128
    x = jax.random.normal(k_x, (batch, in_features), dtype=jnp.float32)
    A = init_rsr_params(k_a, in_features, out_features, dtype=jnp.float32)
    out = jax.block_until_ready(rsr_forward(x, A))
    ref = x @ A
    assert out.shape == (batch, out_features)
    assert jnp.allclose(out, ref, atol=1e-5, rtol=1e-5)

    # Test 2: ragged K / N -- full-extent (un-padded) block dims, masked tail.
    x2 = jax.random.normal(k_x2, (5, 200), dtype=jnp.float32)
    A2 = init_rsr_params(k_a2, 200, 96, dtype=jnp.float32)
    out2 = jax.block_until_ready(rsr_forward(x2, A2))
    ref2 = x2 @ A2
    assert out2.shape == ref2.shape
    assert jnp.allclose(out2, ref2, atol=1e-5, rtol=1e-5)

    # Test 3: multi-step batch grid with a ragged edge block (M=300 -> tm=256, 2 steps).
    x3 = jax.random.normal(k_x3, (300, in_features), dtype=jnp.float32)
    out3 = jax.block_until_ready(rsr_forward(x3, A))
    ref3 = x3 @ A
    assert out3.shape == ref3.shape
    assert jnp.allclose(out3, ref3, atol=1e-5, rtol=1e-5)

    # Test 4: tiny budget forces the K/N-tiled Regime B path.
    out4 = jax.block_until_ready(rsr_forward(x, A, vmem_budget_bytes=1))
    assert jnp.allclose(out4, ref, atol=1e-5, rtol=1e-5)

    print("KERNEL_OK")
</pallas_src>

<mosaic_0001>
module attributes {stable_mosaic.version = 11 : i64} {
  func.func @_rsr_resident_kernel(%arg0: i32, %arg1: memref<8x256xf32, #tpu.memory_space<vmem>>, %arg2: memref<256x128xf32, #tpu.memory_space<vmem>>, %arg3: memref<8x128xf32, #tpu.memory_space<vmem>>) attributes {dimension_semantics = [#tpu.dimension_semantics<parallel>], iteration_bounds = array<i64: 1>, scalar_prefetch = 0 : i64, scratch_operands = 0 : i64, tpu.core_type = #tpu.core_type<tc>, window_params = [{transform_indices = @transform_0, window_bounds = array<i64: 8, 256>}, {pipeline_mode = #tpu.pipeline_mode<synchronous>, transform_indices = @transform_1, window_bounds = array<i64: 256, 128>}, {transform_indices = @transform_2, window_bounds = array<i64: 8, 128>}]} {
    %c0 = arith.constant 0 : index
    %c0_0 = arith.constant 0 : index
    %0 = vector.load %arg1[%c0, %c0_0] : memref<8x256xf32, #tpu.memory_space<vmem>>, vector<8x256xf32>
    %c0_1 = arith.constant 0 : index
    %c0_2 = arith.constant 0 : index
    %1 = vector.load %arg2[%c0_1, %c0_2] : memref<256x128xf32, #tpu.memory_space<vmem>>, vector<256x128xf32>
    %cst = arith.constant dense<0.000000e+00> : vector<8x128xf32>
    %2 = tpu.matmul %0, %1, %cst {dimension_numbers = #tpu.dot_dimension_numbers<[1], [0], [0], [1], [0, 0, 1, 1], [], []>} : vector<8x256xf32>, vector<256x128xf32>, vector<8x128xf32> -> vector<8x128xf32>
    %c0_3 = arith.constant 0 : index
    %c0_4 = arith.constant 0 : index
    %3 = vector.load %arg3[%c0_3, %c0_4] : memref<8x128xf32, #tpu.memory_space<vmem>>, vector<8x128xf32>
    tpu.vector_store %arg3[%c0_3, %c0_4], %2 {strides = array<i32>} : memref<8x128xf32, #tpu.memory_space<vmem>>, vector<8x128xf32>,
    return
  }
  func.func @transform_0(%arg0: i32) -> (i32, i32) {
    %c0_i32 = arith.constant 0 : i32
    %c0_i32_0 = arith.constant 0 : i32
    return %arg0, %c0_i32 : i32, i32
  }
  func.func @transform_1(%arg0: i32) -> (i32, i32) {
    %c0_i32 = arith.constant 0 : i32
    %c0_i32_0 = arith.constant 0 : i32
    %c0_i32_1 = arith.constant 0 : i32
    return %c0_i32, %c0_i32_0 : i32, i32
  }
  func.func @transform_2(%arg0: i32) -> (i32, i32) {
    %c0_i32 = arith.constant 0 : i32
    %c0_i32_0 = arith.constant 0 : i32
    return %arg0, %c0_i32 : i32, i32
  }
}

</mosaic_0001>

<llo_original>
// kernel: tpu_custom_call.1
$region0: #{tpu_custom_call.1}
  #allocation0 [shape = 'u32[]', space=smem, size = 0x4, offset = 0x4, fixed_abs, tag = 'smem constant byte address 0x4 - core index']
  #allocation1 [shape = 'u32[72,128]{1,0:T(1,128)}', space=vmem, size = 0x9000, scoped, tag = 'internal scratch']
  %s0 = inlined_call_operand.hbm [shape: f32[8,256], index: 0, kind: input, shape index: {}]
  %s1 = inlined_call_operand.hbm [shape: f32[256,128], index: 1, kind: input, shape index: {}]
  %s2 = inlined_call_operand.hbm [shape: f32[8,128], index: 2, kind: output, shape index: {}]
  %s3 = sld [smem:[#allocation0]]
  $region26: #{tpu_custom_call.1} parent=0
    _
  %s5 = ssub.s32 1, %s3
  %s6 = scalar_select 0, %s5, %s3
  $region1: #{tpu_custom_call.1} parent=0
    #allocation2 [shape = 'u8[8192]{0}', space=vmem, size = 0x2000, scoped, tag = 'input window, operand 0, single buffered']
    #allocation3 [shape = 's32[1]{0}', space=sflag, size = 0x4, scoped, tag = 'scoped memory for tpu_custom_call.1']
    #allocation4 [shape = 's32[1]{0}', space=sflag, size = 0x4, scoped, tag = 'scoped memory for tpu_custom_call.1']
    #allocation5 [shape = 'u8[131072]{0}', space=vmem, size = 0x20000, scoped, tag = 'input window, operand 1, single buffered']
    #allocation6 [shape = 's32[1]{0}', space=sflag, size = 0x4, scoped, tag = 'scoped memory for tpu_custom_call.1']
    #allocation7 [shape = 'u8[4096]{0}', space=vmem, size = 0x1000, scoped, tag = 'output window, operand 0, single buffered']
    %7 = vsyncpa [#allocation3], 0
    %8 = vsyncpa [#allocation6], 0
    %9 = vsyncpa [#allocation4], 0
    // Predicated region
    $region2: #{tpu_custom_call.1} parent=1 // pred_check
      _
    $region3: #{tpu_custom_call.1} parent=1 // pred_check_branch
      %11 = sbr.rel (0) target = $region5
    $region4: #{tpu_custom_call.1} parent=1 // pred_region
      %13 = vsyncadd [#allocation3], 0
      %s15 = sshll.u32 %s0, 4
      %s16 = int_to_ptr.hbm [resolvable:$true] %s15
      %s17 = sshll.u32 [#allocation2], 4
      %s18 = int_to_ptr.vmem [resolvable:$true] %s17
      %20 = dma.hbm_to_vmem [thread:$0]  %s16, 256, %s18, [#allocation3]
    $region5: #{tpu_custom_call.1} parent=1 // pred_fallthru
      _
    // Predicated region
    $region6: #{tpu_custom_call.1} parent=1 // pred_check
      _
    $region7: #{tpu_custom_call.1} parent=1 // pred_check_branch
      %22 = sbr.rel (0) target = $region9
    $region8: #{tpu_custom_call.1} parent=1 // pred_region
      %24 = vsyncadd [#allocation6], 0
      %s25 = sshll.u32 %s1, 4
      %s26 = int_to_ptr.hbm [resolvable:$true] %s25
      %s27 = sshll.u32 [#allocation5], 4
      %s28 = int_to_ptr.vmem [resolvable:$true] %s27
      %33 = dma.hbm_to_vmem [thread:$0]  %s26, 4096, %s28, [#allocation6], 128, 128, 8
    $region9: #{tpu_custom_call.1} parent=1 // pred_fallthru
      _
    // Predicated region
    $region10: #{tpu_custom_call.1} parent=1 // pred_check
      _
    $region11: #{tpu_custom_call.1} parent=1 // pred_check_branch
      %35 = sbr.rel (0) target = $region13
    $region12: #{tpu_custom_call.1} parent=1 // pred_region
      %37 = dma.done [#allocation3], 256
    $region13: #{tpu_custom_call.1} parent=1 // pred_fallthru
      _
    // Predicated region
    $region14: #{tpu_custom_call.1} parent=1 // pred_check
      _
    $region15: #{tpu_custom_call.1} parent=1 // pred_check_branch
      %39 = sbr.rel (0) target = $region17
    $region16: #{tpu_custom_call.1} parent=1 // pred_region
      %41 = dma.done [#allocation6], 4096
    $region17: #{tpu_custom_call.1} parent=1 // pred_fallthru
      _
    %v42 = vld [vmem:[#allocation2] sm:$0xff]
    %v43 = vld [vmem:[#allocation2 + $0x8] sm:$0xff]
    %v44 = vld [vmem:[#allocation5] sm:$0xff]
    %v45 = vld [vmem:[#allocation5 + $0x8] sm:$0xff]
    %v46 = vld [vmem:[#allocation5 + $0x10] sm:$0xff]
    %v47 = vld [vmem:[#allocation5 + $0x18] sm:$0xff]
    %v48 = vld [vmem:[#allocation5 + $0x20] sm:$0xff]
    %v49 = vld [vmem:[#allocation5 + $0x28] sm:$0xff]
    %v50 = vld [vmem:[#allocation5 + $0x30] sm:$0xff]
    %v51 = vld [vmem:[#allocation5 + $0x38] sm:$0xff]
    %v52 = vld [vmem:[#allocation5 + $0x40] sm:$0xff]
    %v53 = vld [vmem:[#allocation5 + $0x48] sm:$0xff]
    %v54 = vld [vmem:[#allocation5 + $0x50] sm:$0xff]
    %v55 = vld [vmem:[#allocation5 + $0x58] sm:$0xff]
    %v56 = vld [vmem:[#allocation5 + $0x60] sm:$0xff]
    %v57 = vld [vmem:[#allocation5 + $0x68] sm:$0xff]
    %v58 = vld [vmem:[#allocation5 + $0x70] sm:$0xff]
    %v59 = vld [vmem:[#allocation5 + $0x78] sm:$0xff]
    %v60 = vld [vmem:[#allocation5 + $0x80] sm:$0xff]
    %v61 = vld [vmem:[#allocation5 + $0x88] sm:$0xff]
    %v62 = vld [vmem:[#allocation5 + $0x90] sm:$0xff]
    %v63 = vld [vmem:[#allocation5 + $0x98] sm:$0xff]
    %v64 = vld [vmem:[#allocation5 + $0xa0] sm:$0xff]
    %v65 = vld [vmem:[#allocation5 + $0xa8] sm:$0xff]
    %v66 = vld [vmem:[#allocation5 + $0xb0] sm:$0xff]
    %v67 = vld [vmem:[#allocation5 + $0xb8] sm:$0xff]
    %v68 = vld [vmem:[#allocation5 + $0xc0] sm:$0xff]
    %v69 = vld [vmem:[#allocation5 + $0xc8] sm:$0xff]
    %v70 = vld [vmem:[#allocation5 + $0xd0] sm:$0xff]
    %v71 = vld [vmem:[#allocation5 + $0xd8] sm:$0xff]
    %v72 = vld [vmem:[#allocation5 + $0xe0] sm:$0xff]
    %v73 = vld [vmem:[#allocation5 + $0xe8] sm:$0xff]
    %v74 = vld [vmem:[#allocation5 + $0xf0] sm:$0xff]
    %v75 = vld [vmem:[#allocation5 + $0xf8] sm:$0xff]
    %76 = vmatpush.msra.mxu0 %v59
    %77 = vmatpush.msra.mxu0 %v58
    %78 = vmatpush.msra.mxu0 %v57
    %79 = vmatpush.msra.mxu0 %v56
    %80 = vmatpush.msra.mxu0 %v55
    %81 = vmatpush.msra.mxu0 %v54
    %82 = vmatpush.msra.mxu0 %v53
    %83 = vmatpush.msra.mxu0 %v52
    %84 = vmatpush.msra.mxu0 %v51
    %85 = vmatpush.msra.mxu0 %v50
    %86 = vmatpush.msra.mxu0 %v49
    %87 = vmatpush.msra.mxu0 %v48
    %88 = vmatpush.msra.mxu0 %v47
    %89 = vmatpush.msra.mxu0 %v46
    %90 = vmatpush.msra.mxu0 %v45
    %91 = vmatpush.msra.mxu0 %v44
    %92 = vmatmul.f32.gmra.mxu0 %v42
    %v93 = vpop.f32.mrf.mxu0
    %v94 = vadd.f32 0.0, %v93
    %95 = vdwg.mxu0
    %96 = vmatpush.msra.mxu0 %v75
    %97 = vmatpush.msra.mxu0 %v74
    %98 = vmatpush.msra.mxu0 %v73
    %99 = vmatpush.msra.mxu0 %v72
    %100 = vmatpush.msra.mxu0 %v71
    %101 = vmatpush.msra.mxu0 %v70
    %102 = vmatpush.msra.mxu0 %v69
    %103 = vmatpush.msra.mxu0 %v68
    %104 = vmatpush.msra.mxu0 %v67
    %105 = vmatpush.msra.mxu0 %v66
    %106 = vmatpush.msra.mxu0 %v65
    %107 = vmatpush.msra.mxu0 %v64
    %108 = vmatpush.msra.mxu0 %v63
    %109 = vmatpush.msra.mxu0 %v62
    %110 = vmatpush.msra.mxu0 %v61
    %111 = vmatpush.msra.mxu0 %v60
    %112 = vmatmul.f32.gmra.mxu0 %v43
    %v113 = vpop.f32.mrf.mxu0
    %v114 = vadd.f32 %v94, %v113
    %115 = vdwg.mxu0
    %116 = vst [vmem:[#allocation7] sm:$0xff] %v114
    // Predicated region
    $region18: #{tpu_custom_call.1} parent=1 // pred_check
      _
    $region19: #{tpu_custom_call.1} parent=1 // pred_check_branch
      %118 = sbr.rel (0) target = $region21
    $region20: #{tpu_custom_call.1} parent=1 // pred_region
      %120 = vsyncadd [#allocation4], 0
      %s122 = sshll.u32 [#allocation7], 4
      %s123 = int_to_ptr.vmem [resolvable:$true] %s122
      %s124 = sshll.u32 %s2, 4
      %s125 = int_to_ptr.hbm [resolvable:$true] %s124
      %127 = dma.vmem_to_hbm [thread:$0]  %s123, 128, %s125, [#allocation4]
    $region21: #{tpu_custom_call.1} parent=1 // pred_fallthru
      _
    // Predicated region
    $region22: #{tpu_custom_call.1} parent=1 // pred_check
      _
    $region23: #{tpu_custom_call.1} parent=1 // pred_check_branch
      %129 = sbr.rel (0) target = $region25
    $region24: #{tpu_custom_call.1} parent=1 // pred_region
      %131 = dma.done [#allocation4], 128
    $region25: #{tpu_custom_call.1} parent=1 // pred_fallthru
      _
    %132 = vsyncpa [#allocation3], 1
    %133 = vsyncpa [#allocation6], 1
    %134 = vsyncpa [#allocation4], 1

</llo_original>
